<compile_context>
chip_gen: v7x
topology: tpu7x:2x2x1
jax: 0.10.0
libtpu: 0.0.40
codegen_flags: <defaults>
</compile_context>

<pallas_src>
import functools

import jax
import jax.numpy as jnp
from jax import lax
from jax.experimental import pallas as pl
from jax.experimental.pallas import tpu as pltpu


def _round_up(x, m):
    return ((x + m - 1) // m) * m


def _lowest(dtype):
    """Identity element for `max` in the given dtype (dtype-correct)."""
    dtype = jnp.dtype(dtype)
    if jnp.issubdtype(dtype, jnp.floating):
        return float("-inf")
    if jnp.issubdtype(dtype, jnp.integer):
        return int(jnp.iinfo(dtype).min)
    raise TypeError(f"GlobalMaxPool2d: unsupported dtype {dtype}")


# ----------------------------------------------------------------------------
# Kernels
# ----------------------------------------------------------------------------
def _single_step_kernel(x_ref, o_ref):
    # Whole reduction axis resident in one block: one XLU lane reduce + one
    # tiny store.  No scratch, no init/finalize branches.
    o_ref[...] = jnp.max(x_ref[...], axis=-1, keepdims=True)


def _make_multi_step_kernel(R, tile_r, fill):
    """Reduction over several R blocks; (M tiles, R tiles) grid, R last."""
    rem = R % tile_r

    def kernel(x_ref, o_ref, acc_ref):
        j = pl.program_id(1)
        nj = pl.num_programs(1)

        @pl.when(j == 0)
        def _init():
            acc_ref[...] = jnp.full_like(acc_ref, fill)

        def _accumulate(blk):
            # Per-step lane reduce (XLU has slack in this mem-bound kernel)
            # into a tiny (tile_m, 1) native-dtype accumulator.
            acc_ref[...] = jnp.maximum(
                acc_ref[...], jnp.max(blk, axis=-1, keepdims=True)
            )

        if rem == 0:
            _accumulate(x_ref[...])
        else:
            # Keep the ragged-R mask off the hot path: only the last block
            # along R has out-of-range lanes.
            @pl.when(j < nj - 1)
            def _interior():
                _accumulate(x_ref[...])

            @pl.when(j == nj - 1)
            def _edge():
                blk = x_ref[...]
                col = lax.broadcasted_iota(jnp.int32, blk.shape, 1)
                _accumulate(
                    jnp.where(
                        j * tile_r + col < R, blk, jnp.asarray(fill, blk.dtype)
                    )
                )

        @pl.when(j == nj - 1)
        def _finalize():
            o_ref[...] = acc_ref[...]

    return kernel


# ----------------------------------------------------------------------------
# Tiling
# ----------------------------------------------------------------------------
def _choose_tiles(M, R, itemsize, max_block_bytes):
    """Pick (tile_m, tile_r) from the *padded* VMEM footprint of a block."""
    padded_R = _round_up(R, 128)
    row_bytes = padded_R * itemsize  # VMEM bytes of one (lane-padded) row

    # Megacore: keep >= 2 tiles on the "parallel" M axis whenever M >= 16 so a
    # second TensorCore (v7x) always has work; costs at most one extra
    # ~0.35us grid step on single-core chips.
    m_cap = M if M < 16 else _round_up(pl.cdiv(M, 2), 8)

    if 8 * row_bytes <= max_block_bytes:
        # Whole reduction axis fits in one block for >= 8 rows: single R step.
        # Scale tile_m up to fill the block budget (padded footprint).
        tile_r = R
        rows_budget = max(8, (max_block_bytes // row_bytes) // 8 * 8)
        tile_m = M if _round_up(M, 8) <= rows_budget else rows_budget
        tile_m = min(tile_m, m_cap)
    else:
        # Very large H*W: modest row count, multiple R steps.
        tile_m = min(M, m_cap, 256)
        padded_m = _round_up(tile_m, 8)
        tile_r = min(
            R, max(128, (max_block_bytes // (padded_m * itemsize)) // 128 * 128)
        )
    return tile_m, tile_r


# ----------------------------------------------------------------------------
# Host wrapper
# ----------------------------------------------------------------------------
def _global_max_pool(x2, *, max_block_bytes=4 * 1024 * 1024):
    """Max-reduce the last axis of a 2-D (M, R) array with a Pallas kernel."""
    M, R = x2.shape
    if R == 0:
        raise ValueError("GlobalMaxPool2d: cannot reduce an empty extent.")

    itemsize = jnp.dtype(x2.dtype).itemsize
    tile_m, tile_r = _choose_tiles(M, R, itemsize, max_block_bytes)
    grid_m = pl.cdiv(M, tile_m)
    grid_r = pl.cdiv(R, tile_r)

    if grid_r == 1:
        # Single R step: no scratch accumulator, 1-D parallel grid.
        out2 = pl.pallas_call(
            _single_step_kernel,
            out_shape=jax.ShapeDtypeStruct((M, 1), x2.dtype),
            grid_spec=pltpu.PrefetchScalarGridSpec(
                num_scalar_prefetch=0,
                grid=(grid_m,),
                in_specs=[pl.BlockSpec((tile_m, tile_r), lambda i: (i, 0))],
                out_specs=pl.BlockSpec((tile_m, 1), lambda i: (i, 0)),
            ),
            compiler_params=pltpu.CompilerParams(
                dimension_semantics=("parallel",),
            ),
        )(x2)
    else:
        fill = _lowest(x2.dtype)
        out2 = pl.pallas_call(
            _make_multi_step_kernel(R, tile_r, fill),
            out_shape=jax.ShapeDtypeStruct((M, 1), x2.dtype),
            grid_spec=pltpu.PrefetchScalarGridSpec(
                num_scalar_prefetch=0,
                grid=(grid_m, grid_r),
                in_specs=[pl.BlockSpec((tile_m, tile_r), lambda i, j: (i, j))],
                out_specs=pl.BlockSpec((tile_m, 1), lambda i, j: (i, 0)),
                scratch_shapes=[pltpu.VMEM((tile_m, 1), x2.dtype)],
            ),
            compiler_params=pltpu.CompilerParams(
                dimension_semantics=("parallel", "arbitrary"),
            ),
        )(x2)
    return out2.reshape(M)


class GlobalMaxPool2d:
    """JAX/Pallas equivalent of the PyTorch GlobalMaxPool2d module."""

    def __init__(self, dim=(2, 3), keepdim=False):
        self.dim = tuple(dim) if isinstance(dim, (tuple, list)) else (dim,)
        self.keepdim = keepdim

    def __call__(self, x, output_dict=False):
        ndim = x.ndim
        dims = tuple(sorted(d % ndim for d in self.dim))
        kept = tuple(d for d in range(ndim) if d not in dims)

        # Move reduced dims to the end.  For the default dim=(2, 3) on NCHW
        # this permutation is the identity and the reshape is metadata-only.
        perm = kept + dims
        xt = x if perm == tuple(range(ndim)) else jnp.transpose(x, perm)

        kept_shape = tuple(x.shape[d] for d in kept)
        m = functools.reduce(lambda a, b: a * b, kept_shape, 1)
        r = functools.reduce(lambda a, b: a * b, (x.shape[d] for d in dims), 1)

        out = _global_max_pool(xt.reshape(m, r)).reshape(kept_shape)

        if self.keepdim:
            full = [1] * ndim
            for idx, d in enumerate(kept):
                full[d] = kept_shape[idx]
            out = out.reshape(tuple(full))
        return out


if __name__ == "__main__":
    keys = jax.random.split(jax.random.PRNGKey(0), 4)

    # Canonical NCHW input -> M=8, R=256: single-R-step fast path.
    x = jax.random.normal(keys[0], (2, 4, 16, 16), dtype=jnp.float32)

    pool = GlobalMaxPool2d(dim=(2, 3), keepdim=False)
    out = pool(x)
    jax.block_until_ready(out)
    assert out.shape == (2, 4)
    assert jnp.allclose(out, jnp.max(x, axis=(2, 3)))

    pool_keep = GlobalMaxPool2d(dim=(2, 3), keepdim=True)
    out_keep = pool_keep(x)
    jax.block_until_ready(out_keep)
    assert out_keep.shape == (2, 4, 1, 1)
    assert jnp.allclose(out_keep, jnp.max(x, axis=(2, 3), keepdims=True))

    # bf16 NCHW with small spatial (14x14) -> M=32 splits into 2 parallel
    # tiles (megacore), native-dtype path, non-multiple-of-128 lane extent.
    xb = jax.random.normal(keys[1], (4, 8, 14, 14), dtype=jnp.bfloat16)
    outb = GlobalMaxPool2d()(xb)
    jax.block_until_ready(outb)
    assert outb.shape == (4, 8)
    assert jnp.array_equal(outb, jnp.max(xb, axis=(2, 3)))

    # Multi-R-step path: tiny block budget forces grid=(2, 9) with a ragged
    # last R block (2080 % 256 != 0) and a partial last M block (20 % 16).
    x2 = jax.random.normal(keys[2], (20, 2080), dtype=jnp.float32)
    out2 = _global_max_pool(x2, max_block_bytes=8 * 512 * 4)
    jax.block_until_ready(out2)
    assert out2.shape == (20,)
    assert jnp.allclose(out2, jnp.max(x2, axis=1))

    # Integer input through the multi-step ragged path (INT_MIN fill, no
    # lossy float widening).
    x3 = jax.random.randint(keys[3], (8, 700), -1000000, 1000000, dtype=jnp.int32)
    out3 = _global_max_pool(x3, max_block_bytes=8 * 256 * 4)
    jax.block_until_ready(out3)
    assert out3.shape == (8,)
    assert jnp.array_equal(out3, jnp.max(x3, axis=1))

    print("KERNEL_OK")
</pallas_src>

<mosaic_0001>
module attributes {stable_mosaic.version = 11 : i64} {
  func.func @_single_step_kernel(%arg0: i32, %arg1: memref<8x256xf32, #tpu.memory_space<vmem>>, %arg2: memref<8x1xf32, #tpu.memory_space<vmem>>) attributes {dimension_semantics = [#tpu.dimension_semantics<parallel>], iteration_bounds = array<i64: 1>, scalar_prefetch = 0 : i64, scratch_operands = 0 : i64, tpu.core_type = #tpu.core_type<tc>, window_params = [{transform_indices = @transform_0, window_bounds = array<i64: 8, 256>}, {transform_indices = @transform_1, window_bounds = array<i64: 8, 1>}]} {
    %c0 = arith.constant 0 : index
    %c0_0 = arith.constant 0 : index
    %0 = vector.load %arg1[%c0, %c0_0] : memref<8x256xf32, #tpu.memory_space<vmem>>, vector<8x256xf32>
    %cst = arith.constant dense<0xFF800000> : vector<8xf32>
    %1 = vector.multi_reduction <maximumf>, %0, %cst [1] : vector<8x256xf32> to vector<8xf32>
    %2 = vector.shape_cast %1 : vector<8xf32> to vector<8x1xf32>
    %c0_1 = arith.constant 0 : index
    %c0_2 = arith.constant 0 : index
    %3 = vector.load %arg2[%c0_1, %c0_2] : memref<8x1xf32, #tpu.memory_space<vmem>>, vector<8x1xf32>
    tpu.vector_store %arg2[%c0_1, %c0_2], %2 {strides = array<i32>} : memref<8x1xf32, #tpu.memory_space<vmem>>, vector<8x1xf32>,
    return
  }
  func.func @transform_0(%arg0: i32) -> (i32, i32) {
    %c0_i32 = arith.constant 0 : i32
    %c0_i32_0 = arith.constant 0 : i32
    return %arg0, %c0_i32 : i32, i32
  }
  func.func @transform_1(%arg0: i32) -> (i32, i32) {
    %c0_i32 = arith.constant 0 : i32
    %c0_i32_0 = arith.constant 0 : i32
    return %arg0, %c0_i32 : i32, i32
  }
}

</mosaic_0001>

<llo_original>
// kernel: tpu_custom_call.1
$region0: #{tpu_custom_call.1}
  #allocation0 [shape = 'u32[]', space=smem, size = 0x4, offset = 0x4, fixed_abs, tag = 'smem constant byte address 0x4 - core index']
  #allocation1 [shape = 'u32[144,128]{1,0:T(1,128)}', space=vmem, size = 0x12000, scoped, tag = 'internal scratch']
  %s0 = inlined_call_operand.hbm [shape: f32[8,256], index: 0, kind: input, shape index: {}]
  %s1 = inlined_call_operand.vmem [shape: f32[8,1], index: 1, kind: output, shape index: {}]
  %s2 = sld [smem:[#allocation0]]
  $region18: #{tpu_custom_call.1} parent=0
    _
  %s4 = ssub.s32 1, %s2
  %s5 = scalar_select 0, %s4, %s2
  $region1: #{tpu_custom_call.1} parent=0
    #allocation2 [shape = 'u8[8192]{0}', space=vmem, size = 0x2000, scoped, tag = 'input window, operand 0, single buffered']
    #allocation3 [shape = 's32[1]{0}', space=sflag, size = 0x4, scoped, tag = 'scoped memory for tpu_custom_call.1']
    %6 = vsyncpa [#allocation3], 0
    // Predicated region
    $region2: #{tpu_custom_call.1} parent=1 // pred_check
      _
    $region3: #{tpu_custom_call.1} parent=1 // pred_check_branch
      %8 = sbr.rel (0) target = $region5
    $region4: #{tpu_custom_call.1} parent=1 // pred_region
      %s10 = ssub.s32 256, 256
      %11 = vsyncadd [#allocation3], %s10
      %s13 = sshll.u32 [#allocation2], 4
      %s14 = int_to_ptr.vmem [resolvable:$true] %s13
      %16 = dma.hbm_to_vmem [thread:$0]  %s0, 256, %s14, [#allocation3]
    $region5: #{tpu_custom_call.1} parent=1 // pred_fallthru
      _
    // Predicated region
    $region6: #{tpu_custom_call.1} parent=1 // pred_check
      _
    $region7: #{tpu_custom_call.1} parent=1 // pred_check_branch
      %18 = sbr.rel (0) target = $region9
    $region8: #{tpu_custom_call.1} parent=1 // pred_region
      %19 = dma.done [#allocation3], 256
    $region9: #{tpu_custom_call.1} parent=1 // pred_fallthru
      _
    %v20 = vld [vmem:[#allocation2] sm:$0xff]
    %v21 = vld [vmem:[#allocation2 + $0x8] sm:$0xff]
    %v22 = vmax.f32 %v20, %v21
    %23 = vmax.xlane.f32.xlu0 %v22
    %v24 = vpop.xlane.xlu0 %23
    %vm25 = vcmask 7168
    %26 = vst.msk [vmem:[%s1] sm:$0xff] %vm25, %v24
    // Predicated region
    $region10: #{tpu_custom_call.1} parent=1 // pred_check
      _
    $region11: #{tpu_custom_call.1} parent=1 // pred_check_branch
      %28 = sbr.rel (0) target = $region13
    $region12: #{tpu_custom_call.1} parent=1 // pred_region
      _
    $region13: #{tpu_custom_call.1} parent=1 // pred_fallthru
      _
    // Predicated region
    $region14: #{tpu_custom_call.1} parent=1 // pred_check
      _
    $region15: #{tpu_custom_call.1} parent=1 // pred_check_branch
      %30 = sbr.rel (0) target = $region17
    $region16: #{tpu_custom_call.1} parent=1 // pred_region
      _
    $region17: #{tpu_custom_call.1} parent=1 // pred_fallthru
      _
    %31 = vsyncpa [#allocation3], 1

</llo_original>
